<compile_context>
chip_gen: v7x
topology: tpu7x:2x2x1
jax: 0.10.0
libtpu: 0.0.40
codegen_flags: <defaults>
</compile_context>

<pallas_src>
import jax
import jax.numpy as jnp
from jax.experimental import pallas as pl
from jax.experimental.pallas import tpu as pltpu

SMOOTH = 1e-5
MAX_TILE = 8192   # upper bound on the spatial (lane) tile
LANES = 128


def _chip_config():
    """Return (num_tensorcores, working_set_budget_bytes, vmem_limit_bytes)."""
    kind = ""
    try:
        kind = jax.devices()[0].device_kind.lower()
    except Exception:
        pass
    vmem_cap = 128 * 1024 * 1024
    try:
        info = pltpu.get_tpu_info()
        vmem_cap = int(getattr(info, "vmem_capacity_bytes", vmem_cap)) or vmem_cap
    except Exception:
        pass
    is_v7 = ("7" in kind) or (0 < vmem_cap <= 64 * 1024 * 1024)
    if is_v7:
        # v7x: 2 TensorCores, 64 MiB VMEM per core -> conservative budgets.
        return 2, 24 * 1024 * 1024, 48 * 1024 * 1024
    # v5e / v6e: single TensorCore, 128 MiB VMEM -> spend it on big lane tiles.
    return 1, 40 * 1024 * 1024, 64 * 1024 * 1024


def _make_dice_kernel(n_total, tile, tiles_per_core, out_lanes):
    """Kernel accumulating per-row sums of x, y, x*y into lane-dense partials."""

    def reduce_lanes(a):
        # (rows, tile) -> (rows, out_lanes) partial column sums.
        if out_lanes == 1 or tile % out_lanes != 0:
            return jnp.sum(a, axis=1, keepdims=True)
        acc = a[:, 0:out_lanes]
        for k in range(1, tile // out_lanes):     # aligned 128-lane chunk adds
            acc = acc + a[:, k * out_lanes:(k + 1) * out_lanes]
        return acc

    def kernel(x_ref, y_ref, sx_ref, sy_ref, sxy_ref):
        t = pl.program_id(2)

        @pl.when(t == 0)
        def _init():
            sx_ref[...] = jnp.zeros_like(sx_ref)
            sy_ref[...] = jnp.zeros_like(sy_ref)
            sxy_ref[...] = jnp.zeros_like(sxy_ref)

        c = pl.program_id(0)
        start = (c * tiles_per_core + t) * tile        # notional element offset
        remaining = n_total - start                    # dynamic scalar

        x = x_ref[...].astype(jnp.float32)
        y = y_ref[...].astype(jnp.float32)

        def accumulate(xv, yv):
            sx_ref[...] += reduce_lanes(xv)
            sy_ref[...] += reduce_lanes(yv)
            sxy_ref[...] += reduce_lanes(xv * yv)

        @pl.when(remaining >= tile)                    # full tile: no masking cost
        def _full():
            accumulate(x, y)

        @pl.when(remaining < tile)                     # ragged / fully-OOB tile
        def _ragged():
            lane = jax.lax.broadcasted_iota(jnp.int32, x.shape, 1)
            keep = lane < remaining
            accumulate(jnp.where(keep, x, 0.0), jnp.where(keep, y, 0.0))

    return kernel


def soft_dice_loss(x_nchw, y_onehot_nchw, smooth=SMOOTH):
    """SoftDiceLoss(apply_nonlin=None, batch_dice=True, do_bg=True, smooth).

    x, y: (B, C, H, W); y is a one-hot encoding with the same shape as x.
    Returns the scalar loss (same value as the PyTorch module's forward).
    """
    # TODO(synk): loss_mask path of the module is not implemented (mask=None).
    B, C, H, W = x_nchw.shape
    n = H * W
    rows = B * C
    itemsize = max(x_nchw.dtype.itemsize, y_onehot_nchw.dtype.itemsize)

    # --- sublane folding for small C: (BC, N) -> (BC*k, N/k), free contiguous reshape
    sub_min = 8 if itemsize >= 4 else 16
    fold = 1
    while rows * fold < sub_min and n % (fold * 2) == 0:
        fold *= 2
    rows *= fold
    n //= fold

    x2 = x_nchw.reshape(rows, n)          # free reshape: no transpose, no copy, no pad
    y2 = y_onehot_nchw.reshape(rows, n)

    ncores_hw, ws_budget, vmem_limit = _chip_config()

    # --- row tiling keeps the VMEM footprint independent of B*C
    row_block = rows if rows <= 1024 else 512
    row_blocks = pl.cdiv(rows, row_block)

    # --- spatial (lane) tile: biggest multiple of 128 fitting the working set
    # 2 inputs x 2 pipeline buffers in native dtype + ~3 f32 upcast temporaries.
    sub8 = ((row_block + 7) // 8) * 8
    per_lane_bytes = sub8 * (4 * itemsize + 3 * 4)
    desired = max(LANES, min(MAX_TILE, (ws_budget // per_lane_bytes) // LANES * LANES))
    if ncores_hw == 2:
        # Give the second TensorCore work, but never drop below the ~1024-lane knee.
        half = pl.cdiv(pl.cdiv(n, 2), LANES) * LANES
        if half >= 1024:
            desired = min(desired, half)

    if n <= desired:
        tile = n                                  # single spatial block, exact
        out_lanes = LANES if tile % LANES == 0 else 1
    else:
        tile = desired                            # multiple of 128
        out_lanes = LANES

    tiles_raw = pl.cdiv(n, tile)
    ncores = ncores_hw if tiles_raw >= 2 else 1
    tiles_per_core = pl.cdiv(tiles_raw, ncores)
    last_block = tiles_raw - 1

    kernel = _make_dice_kernel(n, tile, tiles_per_core, out_lanes)

    # Clamp the block index so the extra (rounded-up) steps of core 1 never DMA
    # out of bounds; their contribution is zeroed by the in-kernel mask.
    in_spec = pl.BlockSpec(
        (row_block, tile),
        lambda c, r, t: (r, jnp.minimum(c * tiles_per_core + t, last_block)),
    )
    part_shape = jax.ShapeDtypeStruct((ncores, rows, out_lanes), jnp.float32)
    part_spec = pl.BlockSpec((None, row_block, out_lanes), lambda c, r, t: (c, r, 0))

    def run(dim_sem):
        return pl.pallas_call(
            kernel,
            out_shape=(part_shape, part_shape, part_shape),
            grid=(ncores, row_blocks, tiles_per_core),
            in_specs=[in_spec, in_spec],
            out_specs=(part_spec, part_spec, part_spec),
            compiler_params=pltpu.CompilerParams(
                dimension_semantics=dim_sem,
                vmem_limit_bytes=vmem_limit,
            ),
        )(x2, y2)

    if ncores == 2:
        try:
            # Real per-TensorCore split on v7x.
            sx, sy, sxy = run((pltpu.CORE_PARALLEL, pltpu.ARBITRARY, pltpu.ARBITRARY))
        except Exception:
            sx, sy, sxy = run((pltpu.PARALLEL, pltpu.ARBITRARY, pltpu.ARBITRARY))
    else:
        sx, sy, sxy = run((pltpu.ARBITRARY, pltpu.ARBITRARY, pltpu.ARBITRARY))

    # --- tiny epilogue (C-sized) in plain JAX ------------------------------
    # Rows are (b, c, fold) triples; batch_dice=True sums over b (and fold).
    sum_x = sx.sum(axis=(0, 2)).reshape(B, C, fold).sum(axis=(0, 2))
    sum_y = sy.sum(axis=(0, 2)).reshape(B, C, fold).sum(axis=(0, 2))
    tp = sxy.sum(axis=(0, 2)).reshape(B, C, fold).sum(axis=(0, 2))
    fp = sum_x - tp
    fn = sum_y - tp
    nominator = 2.0 * tp + smooth
    denominator = 2.0 * tp + fp + fn + smooth
    dc = nominator / (denominator + 1e-8)    # matches the module's extra +1e-8
    return -jnp.mean(dc)                     # do_bg=True -> mean over all channels


def _reference_soft_dice(x, y, smooth=SMOOTH):
    # pure-JAX reference of the PyTorch forward (batch_dice=True, do_bg=True)
    axes = (0, 2, 3)
    tp = jnp.sum(x * y, axis=axes)
    fp = jnp.sum(x * (1.0 - y), axis=axes)
    fn = jnp.sum((1.0 - x) * y, axis=axes)
    nom = 2.0 * tp + smooth
    den = 2.0 * tp + fp + fn + smooth
    dc = nom / (den + 1e-8)
    return -jnp.mean(dc)


if __name__ == "__main__":
    key = jax.random.PRNGKey(0)
    kx, ky = jax.random.split(key)

    B, C, H, W = 2, 4, 16, 16
    # network output (e.g. already softmaxed probabilities); apply_nonlin=None
    x = jax.random.uniform(kx, (B, C, H, W), dtype=jnp.float32)
    # ground-truth label map -> one-hot (b, c, h, w), matching torch scatter_
    labels = jax.random.randint(ky, (B, H, W), 0, C)
    y_onehot = jnp.transpose(
        jax.nn.one_hot(labels, C, dtype=jnp.float32), (0, 3, 1, 2)
    )

    loss = soft_dice_loss(x, y_onehot)
    loss = jax.block_until_ready(loss)

    ref = _reference_soft_dice(x, y_onehot)
    assert jnp.allclose(loss, ref, rtol=1e-5, atol=1e-6), (loss, ref)

    print("KERNEL_OK")
</pallas_src>

<mosaic_0001>
module attributes {stable_mosaic.version = 11 : i64} {
  func.func @kernel(%arg0: i32, %arg1: i32, %arg2: i32, %arg3: memref<8x256xf32, #tpu.memory_space<vmem>>, %arg4: memref<8x256xf32, #tpu.memory_space<vmem>>, %arg5: memref<1x8x128xf32, #tpu.memory_space<vmem>>, %arg6: memref<1x8x128xf32, #tpu.memory_space<vmem>>, %arg7: memref<1x8x128xf32, #tpu.memory_space<vmem>>) attributes {dimension_semantics = [#tpu.dimension_semantics<arbitrary>, #tpu.dimension_semantics<arbitrary>, #tpu.dimension_semantics<arbitrary>], iteration_bounds = array<i64: 1, 1, 1>, scalar_prefetch = 0 : i64, scratch_operands = 0 : i64, tpu.core_type = #tpu.core_type<tc>, window_params = [{transform_indices = @transform_0, window_bounds = array<i64: 8, 256>}, {transform_indices = @transform_1, window_bounds = array<i64: 8, 256>}, {transform_indices = @transform_2, window_bounds = array<i64: 1, 8, 128>}, {transform_indices = @transform_3, window_bounds = array<i64: 1, 8, 128>}, {transform_indices = @transform_4, window_bounds = array<i64: 1, 8, 128>}]} {
    %c0_i32 = arith.constant 0 : i32
    %0 = arith.cmpi eq, %arg2, %c0_i32 : i32
    %1 = arith.extui %0 : i1 to i32
    %c0_i32_0 = arith.constant 0 : i32
    %2 = arith.cmpi ne, %1, %c0_i32_0 : i32
    scf.if %2 {
      %cst = arith.constant 0.000000e+00 : f32
      %15 = vector.broadcast %cst : f32 to vector<8x128xf32>
      %c0_9 = arith.constant 0 : index
      %c0_10 = arith.constant 0 : index
      %c0_11 = arith.constant 0 : index
      %16 = vector.load %arg5[%c0_9, %c0_10, %c0_11] : memref<1x8x128xf32, #tpu.memory_space<vmem>>, vector<1x8x128xf32>
      %17 = vector.shape_cast %16 : vector<1x8x128xf32> to vector<8x128xf32>
      %18 = vector.shape_cast %15 : vector<8x128xf32> to vector<1x8x128xf32>
      tpu.vector_store %arg5[%c0_9, %c0_10, %c0_11], %18 {strides = array<i32>} : memref<1x8x128xf32, #tpu.memory_space<vmem>>, vector<1x8x128xf32>,
      %cst_12 = arith.constant 0.000000e+00 : f32
      %19 = vector.broadcast %cst_12 : f32 to vector<8x128xf32>
      %c0_13 = arith.constant 0 : index
      %c0_14 = arith.constant 0 : index
      %c0_15 = arith.constant 0 : index
      %20 = vector.load %arg6[%c0_13, %c0_14, %c0_15] : memref<1x8x128xf32, #tpu.memory_space<vmem>>, vector<1x8x128xf32>
      %21 = vector.shape_cast %20 : vector<1x8x128xf32> to vector<8x128xf32>
      %22 = vector.shape_cast %19 : vector<8x128xf32> to vector<1x8x128xf32>
      tpu.vector_store %arg6[%c0_13, %c0_14, %c0_15], %22 {strides = array<i32>} : memref<1x8x128xf32, #tpu.memory_space<vmem>>, vector<1x8x128xf32>,
      %cst_16 = arith.constant 0.000000e+00 : f32
      %23 = vector.broadcast %cst_16 : f32 to vector<8x128xf32>
      %c0_17 = arith.constant 0 : index
      %c0_18 = arith.constant 0 : index
      %c0_19 = arith.constant 0 : index
      %24 = vector.load %arg7[%c0_17, %c0_18, %c0_19] : memref<1x8x128xf32, #tpu.memory_space<vmem>>, vector<1x8x128xf32>
      %25 = vector.shape_cast %24 : vector<1x8x128xf32> to vector<8x128xf32>
      %26 = vector.shape_cast %23 : vector<8x128xf32> to vector<1x8x128xf32>
      tpu.vector_store %arg7[%c0_17, %c0_18, %c0_19], %26 {strides = array<i32>} : memref<1x8x128xf32, #tpu.memory_space<vmem>>, vector<1x8x128xf32>,
    } else {
    }
    %c1_i32 = arith.constant 1 : i32
    %3 = arith.muli %arg0, %c1_i32 : i32
    %4 = arith.addi %3, %arg2 : i32
    %c256_i32 = arith.constant 256 : i32
    %5 = arith.muli %4, %c256_i32 : i32
    %c256_i32_1 = arith.constant 256 : i32
    %6 = arith.subi %c256_i32_1, %5 : i32
    %c0 = arith.constant 0 : index
    %c0_2 = arith.constant 0 : index
    %7 = vector.load %arg3[%c0, %c0_2] : memref<8x256xf32, #tpu.memory_space<vmem>>, vector<8x256xf32>
    %c0_3 = arith.constant 0 : index
    %c0_4 = arith.constant 0 : index
    %8 = vector.load %arg4[%c0_3, %c0_4] : memref<8x256xf32, #tpu.memory_space<vmem>>, vector<8x256xf32>
    %c256_i32_5 = arith.constant 256 : i32
    %9 = arith.cmpi sge, %6, %c256_i32_5 : i32
    %10 = arith.extui %9 : i1 to i32
    %c0_i32_6 = arith.constant 0 : i32
    %11 = arith.cmpi ne, %10, %c0_i32_6 : i32
    scf.if %11 {
      %c0_9 = arith.constant 0 : index
      %c0_10 = arith.constant 0 : index
      %c0_11 = arith.constant 0 : index
      %15 = vector.load %arg5[%c0_9, %c0_10, %c0_11] : memref<1x8x128xf32, #tpu.memory_space<vmem>>, vector<1x8x128xf32>
      %16 = vector.shape_cast %15 : vector<1x8x128xf32> to vector<8x128xf32>
      %17 = vector.extract_strided_slice %7 {offsets = [0, 0], sizes = [8, 128], strides = [1, 1]} : vector<8x256xf32> to vector<8x128xf32>
      %18 = vector.extract_strided_slice %7 {offsets = [0, 128], sizes = [8, 128], strides = [1, 1]} : vector<8x256xf32> to vector<8x128xf32>
      %19 = arith.addf %17, %18 : vector<8x128xf32>
      %20 = arith.addf %16, %19 : vector<8x128xf32>
      %c0_12 = arith.constant 0 : index
      %c0_13 = arith.constant 0 : index
      %c0_14 = arith.constant 0 : index
      %21 = vector.load %arg5[%c0_12, %c0_13, %c0_14] : memref<1x8x128xf32, #tpu.memory_space<vmem>>, vector<1x8x128xf32>
      %22 = vector.shape_cast %21 : vector<1x8x128xf32> to vector<8x128xf32>
      %23 = vector.shape_cast %20 : vector<8x128xf32> to vector<1x8x128xf32>
      tpu.vector_store %arg5[%c0_12, %c0_13, %c0_14], %23 {strides = array<i32>} : memref<1x8x128xf32, #tpu.memory_space<vmem>>, vector<1x8x128xf32>,
      %c0_15 = arith.constant 0 : index
      %c0_16 = arith.constant 0 : index
      %c0_17 = arith.constant 0 : index
      %24 = vector.load %arg6[%c0_15, %c0_16, %c0_17] : memref<1x8x128xf32, #tpu.memory_space<vmem>>, vector<1x8x128xf32>
      %25 = vector.shape_cast %24 : vector<1x8x128xf32> to vector<8x128xf32>
      %26 = vector.extract_strided_slice %8 {offsets = [0, 0], sizes = [8, 128], strides = [1, 1]} : vector<8x256xf32> to vector<8x128xf32>
      %27 = vector.extract_strided_slice %8 {offsets = [0, 128], sizes = [8, 128], strides = [1, 1]} : vector<8x256xf32> to vector<8x128xf32>
      %28 = arith.addf %26, %27 : vector<8x128xf32>
      %29 = arith.addf %25, %28 : vector<8x128xf32>
      %c0_18 = arith.constant 0 : index
      %c0_19 = arith.constant 0 : index
      %c0_20 = arith.constant 0 : index
      %30 = vector.load %arg6[%c0_18, %c0_19, %c0_20] : memref<1x8x128xf32, #tpu.memory_space<vmem>>, vector<1x8x128xf32>
      %31 = vector.shape_cast %30 : vector<1x8x128xf32> to vector<8x128xf32>
      %32 = vector.shape_cast %29 : vector<8x128xf32> to vector<1x8x128xf32>
      tpu.vector_store %arg6[%c0_18, %c0_19, %c0_20], %32 {strides = array<i32>} : memref<1x8x128xf32, #tpu.memory_space<vmem>>, vector<1x8x128xf32>,
      %c0_21 = arith.constant 0 : index
      %c0_22 = arith.constant 0 : index
      %c0_23 = arith.constant 0 : index
      %33 = vector.load %arg7[%c0_21, %c0_22, %c0_23] : memref<1x8x128xf32, #tpu.memory_space<vmem>>, vector<1x8x128xf32>
      %34 = vector.shape_cast %33 : vector<1x8x128xf32> to vector<8x128xf32>
      %35 = arith.mulf %7, %8 : vector<8x256xf32>
      %36 = vector.extract_strided_slice %35 {offsets = [0, 0], sizes = [8, 128], strides = [1, 1]} : vector<8x256xf32> to vector<8x128xf32>
      %37 = vector.extract_strided_slice %35 {offsets = [0, 128], sizes = [8, 128], strides = [1, 1]} : vector<8x256xf32> to vector<8x128xf32>
      %38 = arith.addf %36, %37 : vector<8x128xf32>
      %39 = arith.addf %34, %38 : vector<8x128xf32>
      %c0_24 = arith.constant 0 : index
      %c0_25 = arith.constant 0 : index
      %c0_26 = arith.constant 0 : index
      %40 = vector.load %arg7[%c0_24, %c0_25, %c0_26] : memref<1x8x128xf32, #tpu.memory_space<vmem>>, vector<1x8x128xf32>
      %41 = vector.shape_cast %40 : vector<1x8x128xf32> to vector<8x128xf32>
      %42 = vector.shape_cast %39 : vector<8x128xf32> to vector<1x8x128xf32>
      tpu.vector_store %arg7[%c0_24, %c0_25, %c0_26], %42 {strides = array<i32>} : memref<1x8x128xf32, #tpu.memory_space<vmem>>, vector<1x8x128xf32>,
    } else {
    }
    %c256_i32_7 = arith.constant 256 : i32
    %12 = arith.cmpi slt, %6, %c256_i32_7 : i32
    %13 = arith.extui %12 : i1 to i32
    %c0_i32_8 = arith.constant 0 : i32
    %14 = arith.cmpi ne, %13, %c0_i32_8 : i32
    scf.if %14 {
      %15 = tpu.iota {dimensions = array<i32: 1>} : vector<8x256xi32>
      %16 = vector.broadcast %6 : i32 to vector<8x256xi32>
      %17 = arith.cmpi slt, %15, %16 : vector<8x256xi32>
      %cst = arith.constant 0.000000e+00 : f32
      %18 = vector.broadcast %cst : f32 to vector<8x256xf32>
      %19 = arith.select %17, %7, %18 : vector<8x256xi1>, vector<8x256xf32>
      %cst_9 = arith.constant 0.000000e+00 : f32
      %20 = vector.broadcast %cst_9 : f32 to vector<8x256xf32>
      %21 = arith.select %17, %8, %20 : vector<8x256xi1>, vector<8x256xf32>
      %c0_10 = arith.constant 0 : index
      %c0_11 = arith.constant 0 : index
      %c0_12 = arith.constant 0 : index
      %22 = vector.load %arg5[%c0_10, %c0_11, %c0_12] : memref<1x8x128xf32, #tpu.memory_space<vmem>>, vector<1x8x128xf32>
      %23 = vector.shape_cast %22 : vector<1x8x128xf32> to vector<8x128xf32>
      %24 = vector.extract_strided_slice %19 {offsets = [0, 0], sizes = [8, 128], strides = [1, 1]} : vector<8x256xf32> to vector<8x128xf32>
      %25 = vector.extract_strided_slice %19 {offsets = [0, 128], sizes = [8, 128], strides = [1, 1]} : vector<8x256xf32> to vector<8x128xf32>
      %26 = arith.addf %24, %25 : vector<8x128xf32>
      %27 = arith.addf %23, %26 : vector<8x128xf32>
      %c0_13 = arith.constant 0 : index
      %c0_14 = arith.constant 0 : index
      %c0_15 = arith.constant 0 : index
      %28 = vector.load %arg5[%c0_13, %c0_14, %c0_15] : memref<1x8x128xf32, #tpu.memory_space<vmem>>, vector<1x8x128xf32>
      %29 = vector.shape_cast %28 : vector<1x8x128xf32> to vector<8x128xf32>
      %30 = vector.shape_cast %27 : vector<8x128xf32> to vector<1x8x128xf32>
      tpu.vector_store %arg5[%c0_13, %c0_14, %c0_15], %30 {strides = array<i32>} : memref<1x8x128xf32, #tpu.memory_space<vmem>>, vector<1x8x128xf32>,
      %c0_16 = arith.constant 0 : index
      %c0_17 = arith.constant 0 : index
      %c0_18 = arith.constant 0 : index
      %31 = vector.load %arg6[%c0_16, %c0_17, %c0_18] : memref<1x8x128xf32, #tpu.memory_space<vmem>>, vector<1x8x128xf32>
      %32 = vector.shape_cast %31 : vector<1x8x128xf32> to vector<8x128xf32>
      %33 = vector.extract_strided_slice %21 {offsets = [0, 0], sizes = [8, 128], strides = [1, 1]} : vector<8x256xf32> to vector<8x128xf32>
      %34 = vector.extract_strided_slice %21 {offsets = [0, 128], sizes = [8, 128], strides = [1, 1]} : vector<8x256xf32> to vector<8x128xf32>
      %35 = arith.addf %33, %34 : vector<8x128xf32>
      %36 = arith.addf %32, %35 : vector<8x128xf32>
      %c0_19 = arith.constant 0 : index
      %c0_20 = arith.constant 0 : index
      %c0_21 = arith.constant 0 : index
      %37 = vector.load %arg6[%c0_19, %c0_20, %c0_21] : memref<1x8x128xf32, #tpu.memory_space<vmem>>, vector<1x8x128xf32>
      %38 = vector.shape_cast %37 : vector<1x8x128xf32> to vector<8x128xf32>
      %39 = vector.shape_cast %36 : vector<8x128xf32> to vector<1x8x128xf32>
      tpu.vector_store %arg6[%c0_19, %c0_20, %c0_21], %39 {strides = array<i32>} : memref<1x8x128xf32, #tpu.memory_space<vmem>>, vector<1x8x128xf32>,
      %c0_22 = arith.constant 0 : index
      %c0_23 = arith.constant 0 : index
      %c0_24 = arith.constant 0 : index
      %40 = vector.load %arg7[%c0_22, %c0_23, %c0_24] : memref<1x8x128xf32, #tpu.memory_space<vmem>>, vector<1x8x128xf32>
      %41 = vector.shape_cast %40 : vector<1x8x128xf32> to vector<8x128xf32>
      %42 = arith.mulf %19, %21 : vector<8x256xf32>
      %43 = vector.extract_strided_slice %42 {offsets = [0, 0], sizes = [8, 128], strides = [1, 1]} : vector<8x256xf32> to vector<8x128xf32>
      %44 = vector.extract_strided_slice %42 {offsets = [0, 128], sizes = [8, 128], strides = [1, 1]} : vector<8x256xf32> to vector<8x128xf32>
      %45 = arith.addf %43, %44 : vector<8x128xf32>
      %46 = arith.addf %41, %45 : vector<8x128xf32>
      %c0_25 = arith.constant 0 : index
      %c0_26 = arith.constant 0 : index
      %c0_27 = arith.constant 0 : index
      %47 = vector.load %arg7[%c0_25, %c0_26, %c0_27] : memref<1x8x128xf32, #tpu.memory_space<vmem>>, vector<1x8x128xf32>
      %48 = vector.shape_cast %47 : vector<1x8x128xf32> to vector<8x128xf32>
      %49 = vector.shape_cast %46 : vector<8x128xf32> to vector<1x8x128xf32>
      tpu.vector_store %arg7[%c0_25, %c0_26, %c0_27], %49 {strides = array<i32>} : memref<1x8x128xf32, #tpu.memory_space<vmem>>, vector<1x8x128xf32>,
    } else {
    }
    return
  }
  func.func @transform_0(%arg0: i32, %arg1: i32, %arg2: i32) -> (i32, i32) {
    %c1_i32 = arith.constant 1 : i32
    %0 = arith.muli %arg0, %c1_i32 : i32
    %1 = arith.addi %0, %arg2 : i32
    %c0_i32 = arith.constant 0 : i32
    %2 = arith.minsi %1, %c0_i32 : i32
    %c0_i32_0 = arith.constant 0 : i32
    return %arg1, %2 : i32, i32
  }
  func.func @transform_1(%arg0: i32, %arg1: i32, %arg2: i32) -> (i32, i32) {
    %c1_i32 = arith.constant 1 : i32
    %0 = arith.muli %arg0, %c1_i32 : i32
    %1 = arith.addi %0, %arg2 : i32
    %c0_i32 = arith.constant 0 : i32
    %2 = arith.minsi %1, %c0_i32 : i32
    %c0_i32_0 = arith.constant 0 : i32
    return %arg1, %2 : i32, i32
  }
  func.func @transform_2(%arg0: i32, %arg1: i32, %arg2: i32) -> (i32, i32, i32) {
    %c0_i32 = arith.constant 0 : i32
    %c0_i32_0 = arith.constant 0 : i32
    return %arg0, %arg1, %c0_i32 : i32, i32, i32
  }
  func.func @transform_3(%arg0: i32, %arg1: i32, %arg2: i32) -> (i32, i32, i32) {
    %c0_i32 = arith.constant 0 : i32
    %c0_i32_0 = arith.constant 0 : i32
    return %arg0, %arg1, %c0_i32 : i32, i32, i32
  }
  func.func @transform_4(%arg0: i32, %arg1: i32, %arg2: i32) -> (i32, i32, i32) {
    %c0_i32 = arith.constant 0 : i32
    %c0_i32_0 = arith.constant 0 : i32
    return %arg0, %arg1, %c0_i32 : i32, i32, i32
  }
}

</mosaic_0001>

<llo_original>
// kernel: tpu_custom_call.1
$region0: #{tpu_custom_call.1}
  #allocation0 [shape = 'u32[]', space=smem, size = 0x4, offset = 0x4, fixed_abs, tag = 'smem constant byte address 0x4 - core index']
  #allocation1 [shape = 'u32[144,128]{1,0:T(1,128)}', space=vmem, size = 0x12000, scoped, tag = 'internal scratch']
  %s0 = inlined_call_operand.hbm [shape: f32[8,256], index: 0, kind: input, shape index: {}]
  %s1 = inlined_call_operand.hbm [shape: f32[8,256], index: 1, kind: input, shape index: {}]
  %s2 = inlined_call_operand.hbm [shape: f32[1,8,128], index: 2, kind: output, shape index: {0}]
  %s3 = inlined_call_operand.hbm [shape: f32[1,8,128], index: 3, kind: output, shape index: {1}]
  %s4 = inlined_call_operand.hbm [shape: f32[1,8,128], index: 4, kind: output, shape index: {2}]
  %5 = xla_tuple %s2, %s3, %s4
  %s6 = sld [smem:[#allocation0]]
  $region54: #{tpu_custom_call.1} parent=0
    _
  %s8 = ssub.s32 1, %s6
  %s9 = scalar_select 0, %s8, %s6
  $region1: #{tpu_custom_call.1} parent=0
    #allocation2 [shape = 'u8[8192]{0}', space=vmem, size = 0x2000, scoped, tag = 'input window, operand 0, single buffered']
    #allocation3 [shape = 's32[1]{0}', space=sflag, size = 0x4, scoped, tag = 'scoped memory for tpu_custom_call.1']
    #allocation4 [shape = 's32[1]{0}', space=sflag, size = 0x4, scoped, tag = 'scoped memory for tpu_custom_call.1']
    #allocation5 [shape = 'u8[8192]{0}', space=vmem, size = 0x2000, scoped, tag = 'input window, operand 1, single buffered']
    #allocation6 [shape = 's32[1]{0}', space=sflag, size = 0x4, scoped, tag = 'scoped memory for tpu_custom_call.1']
    #allocation7 [shape = 'u8[4096]{0}', space=vmem, size = 0x1000, scoped, tag = 'output window, operand 0, single buffered']
    #allocation8 [shape = 'u8[4096]{0}', space=vmem, size = 0x1000, scoped, tag = 'output window, operand 1, single buffered']
    #allocation9 [shape = 's32[1]{0}', space=sflag, size = 0x4, scoped, tag = 'scoped memory for tpu_custom_call.1']
    #allocation10 [shape = 'u8[4096]{0}', space=vmem, size = 0x1000, scoped, tag = 'output window, operand 2, single buffered']
    %10 = vsyncpa [#allocation3], 0
    %11 = vsyncpa [#allocation6], 0
    %12 = vsyncpa [#allocation4], 0
    %13 = vsyncpa [#allocation9], 0
    // Predicated region
    $region2: #{tpu_custom_call.1} parent=1 // pred_check
      _
    $region3: #{tpu_custom_call.1} parent=1 // pred_check_branch
      %15 = sbr.rel (0) target = $region5
    $region4: #{tpu_custom_call.1} parent=1 // pred_region
      %s16 = sadd.s32 0, 0
      %p17 = scmp.lt.s32.totalorder %s16, 0
      %s18 = scalar_select %p17, %s16, 0
      %s19 = smul.u32 2, %s18
      %s21 = ssub.s32 256, 256
      %22 = vsyncadd [#allocation3], %s21
      %s23 = smul.addr %s19, 128
      %s24 = scalar_lea.hbm %s0, %s23
      %s26 = sshll.u32 [#allocation2], 4
      %s27 = int_to_ptr.vmem [resolvable:$true] %s26
      %29 = dma.hbm_to_vmem [thread:$0]  %s24, 256, %s27, [#allocation3]
    $region5: #{tpu_custom_call.1} parent=1 // pred_fallthru
      _
    // Predicated region
    $region6: #{tpu_custom_call.1} parent=1 // pred_check
      _
    $region7: #{tpu_custom_call.1} parent=1 // pred_check_branch
      %31 = sbr.rel (0) target = $region9
    $region8: #{tpu_custom_call.1} parent=1 // pred_region
      %s32 = sadd.s32 0, 0
      %p33 = scmp.lt.s32.totalorder %s32, 0
      %s34 = scalar_select %p33, %s32, 0
      %s35 = smul.u32 2, %s34
      %s37 = ssub.s32 256, 256
      %38 = vsyncadd [#allocation6], %s37
      %s39 = smul.addr %s35, 128
      %s40 = scalar_lea.hbm %s1, %s39
      %s42 = sshll.u32 [#allocation5], 4
      %s43 = int_to_ptr.vmem [resolvable:$true] %s42
      %45 = dma.hbm_to_vmem [thread:$0]  %s40, 256, %s43, [#allocation6]
    $region9: #{tpu_custom_call.1} parent=1 // pred_fallthru
      _
    // Predicated region
    $region10: #{tpu_custom_call.1} parent=1 // pred_check
      _
    $region11: #{tpu_custom_call.1} parent=1 // pred_check_branch
      %47 = sbr.rel (0) target = $region13
    $region12: #{tpu_custom_call.1} parent=1 // pred_region
      %48 = dma.done [#allocation3], 256
    $region13: #{tpu_custom_call.1} parent=1 // pred_fallthru
      _
    // Predicated region
    $region14: #{tpu_custom_call.1} parent=1 // pred_check
      _
    $region15: #{tpu_custom_call.1} parent=1 // pred_check_branch
      %50 = sbr.rel (0) target = $region17
    $region16: #{tpu_custom_call.1} parent=1 // pred_region
      %51 = dma.done [#allocation6], 256
    $region17: #{tpu_custom_call.1} parent=1 // pred_fallthru
      _
    %s52 = sadd.s32 0, 0
    %p53 = scmp.lt.s32.totalorder %s52, 0
    %s54 = scalar_select %p53, %s52, 0
    %s55 = smul.u32 2, %s54
    %s56 = sadd.s32 0, 0
    %p57 = scmp.lt.s32.totalorder %s56, 0
    %s58 = scalar_select %p57, %s56, 0
    %s59 = smul.u32 2, %s58
    %p60 = scmp.eq.s32.totalorder 0, 0
    // Predicated region
    $region18: #{tpu_custom_call.1} parent=1 // pred_check
      %p61 = pneg %p60
    $region19: #{tpu_custom_call.1} parent=1 // pred_check_branch
      %63 = sbr.rel (%p61) target = $region21
    $region20: #{tpu_custom_call.1} parent=1 // pred_region
      %64 = vst [vmem:[#allocation7] sm:$0xff] 0.0
      %65 = vst [vmem:[#allocation8] sm:$0xff] 0.0
      %66 = vst [vmem:[#allocation10] sm:$0xff] 0.0
    $region21: #{tpu_custom_call.1} parent=1 // pred_fallthru
      _
    %s67 = sadd.s32 0, 0
    %s68 = smul.u32 %s67, 256
    %s69 = ssub.s32 256, %s68
    %v70 = vld [vmem:[#allocation2] sm:$0xff]
    %v71 = vld [vmem:[#allocation2 + $0x8] sm:$0xff]
    %v72 = vld [vmem:[#allocation5] sm:$0xff]
    %v73 = vld [vmem:[#allocation5 + $0x8] sm:$0xff]
    %p74 = scmp.ge.s32.totalorder %s69, 256
    // Predicated region
    $region22: #{tpu_custom_call.1} parent=1 // pred_check
      %p75 = pneg %p74
    $region23: #{tpu_custom_call.1} parent=1 // pred_check_branch
      %77 = sbr.rel (%p75) target = $region25
    $region24: #{tpu_custom_call.1} parent=1 // pred_region
      %v78 = vld [vmem:[#allocation7] sm:$0xff]
      %v79 = vadd.f32 %v70, %v71
      %v80 = vadd.f32 %v78, %v79
      %81 = vst [vmem:[#allocation7] sm:$0xff] %v80
      %v82 = vld [vmem:[#allocation8] sm:$0xff]
      %v83 = vadd.f32 %v72, %v73
      %v84 = vadd.f32 %v82, %v83
      %85 = vst [vmem:[#allocation8] sm:$0xff] %v84
      %v86 = vld [vmem:[#allocation10] sm:$0xff]
      %v87 = vmul.f32 %v70, %v72
      %v88 = vmul.f32 %v71, %v73
      %v89 = vadd.f32 %v87, %v88
      %v90 = vadd.f32 %v86, %v89
      %91 = vst [vmem:[#allocation10] sm:$0xff] %v90
    $region25: #{tpu_custom_call.1} parent=1 // pred_fallthru
      _
    %p92 = scmp.lt.s32.totalorder %s69, 256
    // Predicated region
    $region26: #{tpu_custom_call.1} parent=1 // pred_check
      %p93 = pneg %p92
    $region27: #{tpu_custom_call.1} parent=1 // pred_check_branch
      %95 = sbr.rel (%p93) target = $region29
    $region28: #{tpu_custom_call.1} parent=1 // pred_region
      %v96 = vlaneseq
      %v97 = vand.u32 %v96, 127
      %v98 = vadd.s32 %v97, 128
      %v99 = vstv %s69
      %vm100 = vcmp.lt.s32.totalorder %v97, %v99
      %vm101 = vcmp.lt.s32.totalorder %v98, %v99
      %v102 = vsel %vm100, %v70, 0.0
      %v103 = vsel %vm101, %v71, 0.0
      %v104 = vsel %vm100, %v72, 0.0
      %v105 = vsel %vm101, %v73, 0.0
      %v106 = vld [vmem:[#allocation7] sm:$0xff]
      %v107 = vadd.f32 %v102, %v103
      %v108 = vadd.f32 %v106, %v107
      %109 = vst [vmem:[#allocation7] sm:$0xff] %v108
      %v110 = vld [vmem:[#allocation8] sm:$0xff]
      %v111 = vadd.f32 %v104, %v105
      %v112 = vadd.f32 %v110, %v111
      %113 = vst [vmem:[#allocation8] sm:$0xff] %v112
      %v114 = vld [vmem:[#allocation10] sm:$0xff]
      %v115 = vmul.f32 %v102, %v104
      %v116 = vmul.f32 %v103, %v105
      %v117 = vadd.f32 %v115, %v116
      %v118 = vadd.f32 %v114, %v117
      %119 = vst [vmem:[#allocation10] sm:$0xff] %v118
    $region29: #{tpu_custom_call.1} parent=1 // pred_fallthru
      _
    // Predicated region
    $region30: #{tpu_custom_call.1} parent=1 // pred_check
      _
    $region31: #{tpu_custom_call.1} parent=1 // pred_check_branch
      %121 = sbr.rel (0) target = $region33
    $region32: #{tpu_custom_call.1} parent=1 // pred_region
      %s123 = ssub.s32 128, 128
      %124 = vsyncadd [#allocation4], %s123
      %s126 = sshll.u32 [#allocation7], 4
      %s127 = int_to_ptr.vmem [resolvable:$true] %s126
      %129 = dma.vmem_to_hbm [thread:$0]  %s127, 128, %s2, [#allocation4]
    $region33: #{tpu_custom_call.1} parent=1 // pred_fallthru
      _
    // Predicated region
    $region34: #{tpu_custom_call.1} parent=1 // pred_check
      _
    $region35: #{tpu_custom_call.1} parent=1 // pred_check_branch
      %131 = sbr.rel (0) target = $region37
    $region36: #{tpu_custom_call.1} parent=1 // pred_region
      %s133 = ssub.s32 128, 128
      %134 = vsyncadd [#allocation9], %s133
      %s136 = sshll.u32 [#allocation8], 4
      %s137 = int_to_ptr.vmem [resolvable:$true] %s136
      %139 = dma.vmem_to_hbm [thread:$0]  %s137, 128, %s3, [#allocation9]
    $region37: #{tpu_custom_call.1} parent=1 // pred_fallthru
      _
    // Predicated region
    $region38: #{tpu_custom_call.1} parent=1 // pred_check
      _
    $region39: #{tpu_custom_call.1} parent=1 // pred_check_branch
      %141 = sbr.rel (0) target = $region41
    $region40: #{tpu_custom_call.1} parent=1 // pred_region
      %s143 = ssub.s32 128, 128
      %144 = vsyncadd [#allocation9], %s143
      %s146 = sshll.u32 [#allocation10], 4
      %s147 = int_to_ptr.vmem [resolvable:$true] %s146
      %149 = dma.vmem_to_hbm [thread:$0]  %s147, 128, %s4, [#allocation9]
    $region41: #{tpu_custom_call.1} parent=1 // pred_fallthru
      _
    // Predicated region
    $region42: #{tpu_custom_call.1} parent=1 // pred_check
      _
    $region43: #{tpu_custom_call.1} parent=1 // pred_check_branch
      %151 = sbr.rel (0) target = $region45
    $region44: #{tpu_custom_call.1} parent=1 // pred_region
      %152 = dma.done [#allocation4], 128
    $region45: #{tpu_custom_call.1} parent=1 // pred_fallthru
      _
    // Predicated region
    $region46: #{tpu_custom_call.1} parent=1 // pred_check
      _
    $region47: #{tpu_custom_call.1} parent=1 // pred_check_branch
      %154 = sbr.rel (0) target = $region49
    $region48: #{tpu_custom_call.1} parent=1 // pred_region
      %155 = dma.done [#allocation9], 128
    $region49: #{tpu_custom_call.1} parent=1 // pred_fallthru
      _
    // Predicated region
    $region50: #{tpu_custom_call.1} parent=1 // pred_check
      _
    $region51: #{tpu_custom_call.1} parent=1 // pred_check_branch
      %157 = sbr.rel (0) target = $region53
    $region52: #{tpu_custom_call.1} parent=1 // pred_region
      %158 = dma.done [#allocation9], 128
    $region53: #{tpu_custom_call.1} parent=1 // pred_fallthru
      _
    %159 = vsyncpa [#allocation3], 1
    %160 = vsyncpa [#allocation6], 1
    %161 = vsyncpa [#allocation4], 1
    %162 = vsyncpa [#allocation9], 1

</llo_original>
